<compile_context>
chip_gen: v7x
topology: tpu7x:2x2x1
jax: 0.10.0
libtpu: 0.0.40
codegen_flags: <defaults>
</compile_context>

<pallas_src>
import functools

import jax
import jax.numpy as jnp
from jax.experimental import pallas as pl
from jax.experimental.pallas import tpu as pltpu


def _round_up(x, m):
    return ((x + m - 1) // m) * m


def _cdiv(a, b):
    return (a + b - 1) // b


def _physical_vmem_bytes():
    """Per-core VMEM capacity; falls back to the smallest generation (v7x)."""
    try:
        info = pltpu.get_tpu_info()
        v = int(info.vmem_capacity_bytes)
        if v > 0:
            return v
    except Exception:
        pass
    return 64 * 1024 * 1024


def _choose_tiles(N, C, itemsize, tile_n, tile_c, *, phys_vmem,
                  apply_log_softmax):
    # --- class tile ---------------------------------------------------------
    if tile_c is None:
        # Small class counts: whole class axis in one block.  Vocab-sized C:
        # lane-dense 2K tiles; classes >= C in the last tile are masked
        # in-kernel, so C need not divide tile_c.
        tile_c = C if C <= 4096 else 2048
    tile_c = int(tile_c)
    if tile_c >= C:
        tile_c = C
    elif tile_c % 128 != 0:
        raise ValueError('tile_c must be a multiple of 128 (or >= num classes)')
    n_cls_blocks = _cdiv(C, tile_c)

    # --- row tile -----------------------------------------------------------
    if tile_n is None:
        # Generation-aware budget: v5e/v6e have 128 MiB physical VMEM, v7x 64.
        budget = (20 if phys_vmem >= 100 * 1024 * 1024 else 10) * 1024 * 1024
        bufs = 3 if n_cls_blocks > 1 else 2              # logits DMA buffers
        per_row = tile_c * (bufs * itemsize              # pipelined DMA buffers
                            + itemsize                   # fused weight*logits temp
                            + (4 if apply_log_softmax else 0))  # f32 LSE temp
        tile_n = max(8, budget // max(per_row, 1))
        tile_n = min(tile_n, 2048)
    tile_n = max(8, (int(tile_n) // 8) * 8)
    tile_n = min(tile_n, _round_up(N, 8))
    if N > 8:
        # Keep >= 2 row blocks so the 'parallel' row axis can be split across
        # v7x's two TensorCores (free on single-core v5e/v6e).
        tile_n = min(tile_n, _round_up((N + 1) // 2, 8))
    return max(tile_n, 8), tile_c


def _ls_ce_kernel(targets_ref, logits_ref, out_ref, m_ref, s_ref, *,
                  tile_c, num_valid_classes, ignore_index, smooth_val,
                  confidence, label_sum, apply_log_softmax, mask_classes):
    """One (row-tile, class-tile) grid step.

    targets_ref: (tile_n, 1) int32 (rows past N carry ignore_index)
    logits_ref:  (tile_n, tile_c) native dtype (over-read rows/lanes masked)
    out_ref:     (tile_n, 1) f32, resident across the class axis; accumulates
                 sum_c label_c * raw_logit_c, rewritten with the final per-row
                 loss at the last class step.
    m_ref/s_ref: (tile_n, 1) f32 running max / sum for the streamed logsumexp
                 (transformer path only).
    """
    k = pl.program_id(1)
    last_k = pl.num_programs(1) - 1

    @pl.when(k == 0)
    def _init():
        out_ref[...] = jnp.zeros_like(out_ref)
        if apply_log_softmax:
            m_ref[...] = jnp.full_like(m_ref, -jnp.inf)
            s_ref[...] = jnp.zeros_like(s_ref)

    tgt = targets_ref[...]                                    # (tile_n, 1) int32
    x = logits_ref[...]                                       # native dtype
    cdt = x.dtype

    # Global class ids for this tile as a single (1, tile_c) row (no full-tile
    # iota temporary).
    class_ids = jax.lax.broadcasted_iota(jnp.int32, (1, tile_c), 1) + k * tile_c
    onehot = class_ids == tgt                                 # (tile_n, tile_c)
    if mask_classes:
        valid = class_ids < num_valid_classes                 # (1, tile_c)

    # Fused label weight (confidence at target, smooth elsewhere) in the native
    # dtype -> one lane reduction per tile, accumulated in f32.
    weight = jnp.where(onehot, jnp.asarray(confidence, dtype=cdt),
                       jnp.asarray(smooth_val, dtype=cdt))
    x_dot = (jnp.where(valid, x, jnp.asarray(0.0, dtype=cdt))
             if mask_classes else x)
    out_ref[...] += jnp.sum(weight * x_dot, axis=-1, keepdims=True,
                            dtype=jnp.float32)

    if apply_log_softmax:
        # Streamed (flash-style) logsumexp across class tiles, f32 accumulators.
        xf = x.astype(jnp.float32)
        if mask_classes:
            xf = jnp.where(valid, xf, -jnp.inf)
        m_prev = m_ref[...]
        m_new = jnp.maximum(m_prev, jnp.max(xf, axis=-1, keepdims=True))
        s_ref[...] = (s_ref[...] * jnp.exp(m_prev - m_new)
                      + jnp.sum(jnp.exp(xf - m_new), axis=-1, keepdims=True))
        m_ref[...] = m_new

    @pl.when(k == last_k)
    def _finalize():
        acc = out_ref[...]                        # sum_c label_c * raw_logit_c
        if apply_log_softmax:
            # loss = -sum_c label_c*(raw_c - lse) = label_sum*lse - acc
            lse = m_ref[...] + jnp.log(s_ref[...])
            loss = jnp.float32(label_sum) * lse - acc
        else:
            loss = -acc
        # Ignored rows (and the over-read rows of a partial last row block,
        # whose targets are padded with ignore_index) contribute exactly 0.
        out_ref[...] = jnp.where(tgt == ignore_index, jnp.float32(0.0), loss)


def label_smoothed_cross_entropy(logits, targets, *, num_classes, ignore_index,
                                 smoothing=0.1, reduction='sum',
                                 architecture='las', tile_n=None, tile_c=None):
    """logits: (N, C) float (any dtype); targets: (N,) int. Returns scalar loss."""
    reduction = reduction.lower()
    architecture = architecture.lower()
    if reduction not in ('sum', 'mean'):
        raise ValueError(f'Unsupported reduction method {reduction}')
    # TODO(synk): smoothing == 0.0 falls back to plain F.cross_entropy in the
    # reference; only the smoothing > 0 hot path is implemented in the kernel.
    assert smoothing > 0.0
    apply_log_softmax = (architecture == 'transformer')

    N, C = logits.shape
    itemsize = jnp.dtype(logits.dtype).itemsize
    phys_vmem = _physical_vmem_bytes()
    tile_n, tile_c = _choose_tiles(N, C, itemsize, tile_n, tile_c,
                                   phys_vmem=phys_vmem,
                                   apply_log_softmax=apply_log_softmax)

    n_row_blocks = _cdiv(N, tile_n)
    n_cls_blocks = _cdiv(C, tile_c)
    mask_classes = (C % tile_c) != 0
    N_pad = n_row_blocks * tile_n

    # Only the tiny targets vector is padded (padded rows carry ignore_index so
    # they are zeroed in-kernel).  The (N, C) logits are NOT padded or copied.
    targets_2d = targets.astype(jnp.int32).reshape(N, 1)
    if N_pad != N:
        targets_2d = jnp.pad(targets_2d, ((0, N_pad - N), (0, 0)),
                             constant_values=ignore_index)

    smooth_val = float(smoothing) / (num_classes - 1)
    confidence = 1.0 - float(smoothing)
    # sum_c label[row, c] for a non-ignored row (== 1.0 when C == num_classes).
    label_sum = smooth_val * (C - 1) + confidence

    kernel = functools.partial(
        _ls_ce_kernel,
        tile_c=tile_c,
        num_valid_classes=C,
        ignore_index=int(ignore_index),
        smooth_val=smooth_val,
        confidence=confidence,
        label_sum=label_sum,
        apply_log_softmax=apply_log_softmax,
        mask_classes=mask_classes,
    )

    # Logits BlockSpec; on the class-tiled path ask for 3-deep buffering so the
    # short per-block compute doesn't expose DMA issue latency.
    logits_spec = pl.BlockSpec((tile_n, tile_c), lambda i, k: (i, k))
    bufs = 2
    if n_cls_blocks > 1:
        try:
            logits_spec = pl.BlockSpec((tile_n, tile_c), lambda i, k: (i, k),
                                       pipeline_mode=pl.Buffered(3))
            bufs = 3
        except Exception:
            pass  # older jax: fall back to default double buffering

    # VMEM: pipelined DMA buffers (native dtype) + in-kernel temps + headroom,
    # clamped below the physical capacity of this generation.
    temps = tile_n * tile_c * (itemsize + (4 if apply_log_softmax else itemsize))
    vmem_limit = bufs * tile_n * tile_c * itemsize + temps + (2 << 20)
    vmem_limit = int(min(max(vmem_limit, 16 * 1024 * 1024),
                         (phys_vmem * 3) // 4))

    cost = pl.CostEstimate(
        flops=int((5 if apply_log_softmax else 3) * N * C),
        transcendentals=int(N * C + N) if apply_log_softmax else 0,
        bytes_accessed=int(N * C * itemsize + 2 * N_pad * 4),
    )

    per_row = pl.pallas_call(
        kernel,
        out_shape=jax.ShapeDtypeStruct((N_pad, 1), jnp.float32),
        grid_spec=pltpu.PrefetchScalarGridSpec(
            num_scalar_prefetch=0,
            grid=(n_row_blocks, n_cls_blocks),
            in_specs=[
                pl.BlockSpec((tile_n, 1), lambda i, k: (i, 0)),   # targets
                logits_spec,                                      # logits
            ],
            out_specs=pl.BlockSpec((tile_n, 1), lambda i, k: (i, 0)),
            scratch_shapes=[pltpu.VMEM((tile_n, 1), jnp.float32),   # running max
                            pltpu.VMEM((tile_n, 1), jnp.float32)],  # running sum
        ),
        compiler_params=pltpu.CompilerParams(
            dimension_semantics=("parallel", "arbitrary"),
            vmem_limit_bytes=vmem_limit,
        ),
        cost_estimate=cost,
    )(targets_2d, logits)

    loss = jnp.sum(per_row)            # padded / ignored rows are exactly 0
    if reduction == 'mean':
        # torch.mean over the full (N, C) (-label * logits) tensor.
        loss = loss / jnp.float32(N * C)
    return loss


def _reference(logits, targets, *, num_classes, ignore_index, smoothing,
               reduction, architecture):
    logits = logits.astype(jnp.float32)
    if architecture == 'transformer':
        logits = jax.nn.log_softmax(logits, axis=-1)
    N, C = logits.shape
    smooth_val = smoothing / (num_classes - 1)
    label = jnp.full((N, C), smooth_val, jnp.float32)
    onehot = jax.nn.one_hot(targets, C, dtype=jnp.bool_)
    label = jnp.where(onehot, 1.0 - smoothing, label)
    label = jnp.where((targets == ignore_index)[:, None], 0.0, label)
    vals = -label * logits
    return jnp.sum(vals) if reduction == 'sum' else jnp.mean(vals)


if __name__ == "__main__":
    key = jax.random.PRNGKey(0)
    ignore_index = 0

    # --- test 1: 'las' / sum, f32, multiple row blocks (explicit tile_n) ----
    batch, seq, num_classes = 2, 8, 32
    N = batch * seq
    k1, k2 = jax.random.split(key)
    raw = jax.random.normal(k1, (N, num_classes), dtype=jnp.float32)
    logits_las = jax.nn.log_softmax(raw, axis=-1)   # 'las' logits are log-probs
    targets = jax.random.randint(k2, (N,), 0, num_classes, dtype=jnp.int32)
    targets = targets.at[3].set(ignore_index).at[10].set(ignore_index)

    loss = label_smoothed_cross_entropy(
        logits_las, targets, num_classes=num_classes, ignore_index=ignore_index,
        smoothing=0.1, reduction='sum', architecture='las', tile_n=8)
    loss = jax.block_until_ready(loss)
    ref = _reference(logits_las, targets, num_classes=num_classes,
                     ignore_index=ignore_index, smoothing=0.1,
                     reduction='sum', architecture='las')
    assert jnp.allclose(loss, ref, rtol=1e-5, atol=1e-5), (loss, ref)

    # --- test 2: 'transformer' / mean, auto tile selection ------------------
    loss_t = label_smoothed_cross_entropy(
        raw, targets, num_classes=num_classes, ignore_index=ignore_index,
        smoothing=0.1, reduction='mean', architecture='transformer')
    loss_t = jax.block_until_ready(loss_t)
    ref_t = _reference(raw, targets, num_classes=num_classes,
                       ignore_index=ignore_index, smoothing=0.1,
                       reduction='mean', architecture='transformer')
    assert jnp.allclose(loss_t, ref_t, rtol=1e-5, atol=1e-5), (loss_t, ref_t)

    # --- test 3: 'transformer' / sum with class-tiled streamed logsumexp,
    #     non-divisible rows (N=20, tile_n=16) and classes (C=320, tile_c=128)
    N3, C3 = 20, 320
    k3, k4 = jax.random.split(k1)
    raw3 = jax.random.normal(k3, (N3, C3), dtype=jnp.float32)
    tgt3 = jax.random.randint(k4, (N3,), 0, C3, dtype=jnp.int32)
    tgt3 = tgt3.at[5].set(ignore_index)
    loss3 = label_smoothed_cross_entropy(
        raw3, tgt3, num_classes=C3, ignore_index=ignore_index,
        smoothing=0.1, reduction='sum', architecture='transformer',
        tile_n=16, tile_c=128)
    loss3 = jax.block_until_ready(loss3)
    ref3 = _reference(raw3, tgt3, num_classes=C3, ignore_index=ignore_index,
                      smoothing=0.1, reduction='sum', architecture='transformer')
    assert jnp.allclose(loss3, ref3, rtol=1e-4, atol=1e-3), (loss3, ref3)

    # --- test 4: bf16 logits on the 'las' path (native-dtype elementwise,
    #     f32 accumulation) --------------------------------------------------
    logits_bf16 = logits_las.astype(jnp.bfloat16)
    loss_b = label_smoothed_cross_entropy(
        logits_bf16, targets, num_classes=num_classes,
        ignore_index=ignore_index, smoothing=0.1, reduction='sum',
        architecture='las')
    loss_b = jax.block_until_ready(loss_b)
    ref_b = _reference(logits_bf16, targets, num_classes=num_classes,
                       ignore_index=ignore_index, smoothing=0.1,
                       reduction='sum', architecture='las')
    assert jnp.allclose(loss_b, ref_b, rtol=2e-2, atol=1e-2), (loss_b, ref_b)

    print("KERNEL_OK")
</pallas_src>

<mosaic_0001>
module attributes {stable_mosaic.version = 11 : i64} {
  func.func @_ls_ce_kernel(%arg0: i32, %arg1: i32, %arg2: memref<8x1xi32, #tpu.memory_space<vmem>>, %arg3: memref<8x32xf32, #tpu.memory_space<vmem>>, %arg4: memref<8x1xf32, #tpu.memory_space<vmem>>, %arg5: memref<8x1xf32, #tpu.memory_space<vmem>>, %arg6: memref<8x1xf32, #tpu.memory_space<vmem>>) attributes {dimension_semantics = [#tpu.dimension_semantics<parallel>, #tpu.dimension_semantics<arbitrary>], iteration_bounds = array<i64: 2, 1>, scalar_prefetch = 0 : i64, scratch_operands = 2 : i64, tpu.core_type = #tpu.core_type<tc>, window_params = [{transform_indices = @transform_0, window_bounds = array<i64: 8, 1>}, {transform_indices = @transform_1, window_bounds = array<i64: 8, 32>}, {transform_indices = @transform_2, window_bounds = array<i64: 8, 1>}]} {
    %c0_i32 = arith.constant 0 : i32
    %0 = arith.cmpi eq, %arg1, %c0_i32 : i32
    %1 = arith.extui %0 : i1 to i32
    %c0_i32_0 = arith.constant 0 : i32
    %2 = arith.cmpi ne, %1, %c0_i32_0 : i32
    scf.if %2 {
      %cst_12 = arith.constant 0.000000e+00 : f32
      %24 = vector.broadcast %cst_12 : f32 to vector<8x1xf32>
      %c0_13 = arith.constant 0 : index
      %c0_14 = arith.constant 0 : index
      %25 = vector.load %arg4[%c0_13, %c0_14] : memref<8x1xf32, #tpu.memory_space<vmem>>, vector<8x1xf32>
      tpu.vector_store %arg4[%c0_13, %c0_14], %24 {strides = array<i32>} : memref<8x1xf32, #tpu.memory_space<vmem>>, vector<8x1xf32>,
    } else {
    }
    %c0 = arith.constant 0 : index
    %c0_1 = arith.constant 0 : index
    %3 = vector.load %arg2[%c0, %c0_1] : memref<8x1xi32, #tpu.memory_space<vmem>>, vector<8x1xi32>
    %c0_2 = arith.constant 0 : index
    %c0_3 = arith.constant 0 : index
    %4 = vector.load %arg3[%c0_2, %c0_3] : memref<8x32xf32, #tpu.memory_space<vmem>>, vector<8x32xf32>
    %5 = tpu.iota {dimensions = array<i32: 1>} : vector<1x32xi32>
    %c32_i32 = arith.constant 32 : i32
    %6 = arith.muli %arg1, %c32_i32 : i32
    %7 = vector.broadcast %6 : i32 to vector<1x32xi32>
    %8 = arith.addi %5, %7 : vector<1x32xi32>
    %9 = vector.broadcast %8 : vector<1x32xi32> to vector<8x32xi32>
    %10 = vector.broadcast %3 : vector<8x1xi32> to vector<8x32xi32>
    %11 = arith.cmpi eq, %9, %10 : vector<8x32xi32>
    %cst = arith.constant 0.899999976 : f32
    %cst_4 = arith.constant 0.0032258064 : f32
    %12 = vector.broadcast %cst : f32 to vector<8x32xf32>
    %13 = vector.broadcast %cst_4 : f32 to vector<8x32xf32>
    %14 = arith.select %11, %12, %13 : vector<8x32xi1>, vector<8x32xf32>
    %c0_5 = arith.constant 0 : index
    %c0_6 = arith.constant 0 : index
    %15 = vector.load %arg4[%c0_5, %c0_6] : memref<8x1xf32, #tpu.memory_space<vmem>>, vector<8x1xf32>
    %16 = arith.mulf %14, %4 : vector<8x32xf32>
    %cst_7 = arith.constant dense<0.000000e+00> : vector<8xf32>
    %17 = vector.multi_reduction <add>, %16, %cst_7 [1] : vector<8x32xf32> to vector<8xf32>
    %18 = vector.shape_cast %17 : vector<8xf32> to vector<8x1xf32>
    %19 = arith.addf %15, %18 : vector<8x1xf32>
    %c0_8 = arith.constant 0 : index
    %c0_9 = arith.constant 0 : index
    %20 = vector.load %arg4[%c0_8, %c0_9] : memref<8x1xf32, #tpu.memory_space<vmem>>, vector<8x1xf32>
    tpu.vector_store %arg4[%c0_8, %c0_9], %19 {strides = array<i32>} : memref<8x1xf32, #tpu.memory_space<vmem>>, vector<8x1xf32>,
    %c0_i32_10 = arith.constant 0 : i32
    %21 = arith.cmpi eq, %arg1, %c0_i32_10 : i32
    %22 = arith.extui %21 : i1 to i32
    %c0_i32_11 = arith.constant 0 : i32
    %23 = arith.cmpi ne, %22, %c0_i32_11 : i32
    scf.if %23 {
      %c0_12 = arith.constant 0 : index
      %c0_13 = arith.constant 0 : index
      %24 = vector.load %arg4[%c0_12, %c0_13] : memref<8x1xf32, #tpu.memory_space<vmem>>, vector<8x1xf32>
      %cst_14 = arith.constant 0.000000e+00 : f32
      %25 = vector.broadcast %cst_14 : f32 to vector<8x1xf32>
      %26 = arith.subf %25, %24 : vector<8x1xf32>
      %c0_i32_15 = arith.constant 0 : i32
      %27 = vector.broadcast %c0_i32_15 : i32 to vector<8x1xi32>
      %28 = arith.cmpi eq, %3, %27 : vector<8x1xi32>
      %cst_16 = arith.constant 0.000000e+00 : f32
      %29 = vector.broadcast %cst_16 : f32 to vector<8x1xf32>
      %30 = arith.select %28, %29, %26 : vector<8x1xi1>, vector<8x1xf32>
      %c0_17 = arith.constant 0 : index
      %c0_18 = arith.constant 0 : index
      %31 = vector.load %arg4[%c0_17, %c0_18] : memref<8x1xf32, #tpu.memory_space<vmem>>, vector<8x1xf32>
      tpu.vector_store %arg4[%c0_17, %c0_18], %30 {strides = array<i32>} : memref<8x1xf32, #tpu.memory_space<vmem>>, vector<8x1xf32>,
    } else {
    }
    return
  }
  func.func @transform_0(%arg0: i32, %arg1: i32) -> (i32, i32) {
    %c0_i32 = arith.constant 0 : i32
    %c0_i32_0 = arith.constant 0 : i32
    return %arg0, %c0_i32 : i32, i32
  }
  func.func @transform_1(%arg0: i32, %arg1: i32) -> (i32, i32) {
    %c0_i32 = arith.constant 0 : i32
    return %arg0, %arg1 : i32, i32
  }
  func.func @transform_2(%arg0: i32, %arg1: i32) -> (i32, i32) {
    %c0_i32 = arith.constant 0 : i32
    %c0_i32_0 = arith.constant 0 : i32
    return %arg0, %c0_i32 : i32, i32
  }
}

</mosaic_0001>

<llo_original>
// kernel: tpu_custom_call.1
$region0: #{tpu_custom_call.1}
  #allocation0 [shape = 'u32[]', space=smem, size = 0x4, offset = 0x4, fixed_abs, tag = 'smem constant byte address 0x4 - core index']
  #allocation1 [shape = 'u32[144,128]{1,0:T(1,128)}', space=vmem, size = 0x12000, scoped, tag = 'internal scratch']
  #allocation2 [shape = 'f32[8,1]{1,0:T(8,128)}', space=vmem, size = 0x1000, scoped, tag = 'scratch operand']
  #allocation3 [shape = 'f32[8,1]{1,0:T(8,128)}', space=vmem, size = 0x1000, scoped, tag = 'scratch operand']
  %s0 = inlined_call_operand.vmem [shape: s32[16,1], index: 0, kind: input, shape index: {}]
  %s1 = inlined_call_operand.vmem [shape: f32[16,32], index: 1, kind: input, shape index: {}]
  %s2 = inlined_call_operand.vmem [shape: f32[16,1], index: 2, kind: output, shape index: {}]
  %s3 = sld [smem:[#allocation0]]
  $region49: #{tpu_custom_call.1} parent=0
    _
  %s5 = ssub.s32 1, %s3
  %s6 = scalar_select 0, %s5, %s3
  loop: start=0, step=1, limit=4
  $region2: #{tpu_custom_call.1} parent=0 // loop_pre_header
    _
  $region3: #{tpu_custom_call.1} parent=0 // loop_header
    %s8 = sphi 0, %s12
    %p9 = scmp.ge.s32.totalorder %s8, 4
    %s15 = sphi 0, %s27
    %s16 = sphi 0, %s23
    %s17 = sphi 0, %s15
    %s18 = sphi 0, %s16
    %s19 = sphi 0, %s17
    %s20 = sphi 0, %s18
    %s30 = sphi 0, %s32
    %s33 = sphi 0, %s30
    %s34 = sphi 0, %s33
    %s50 = sphi 0, %s34
    %s58 = sphi 0, %s60
    %s61 = sphi 0, %s58
    %s62 = sphi 0, %s61
    %s78 = sphi 0, %s62
    %s84 = sphi 0, %s86
    %s87 = sphi 0, %s84
    %s88 = sphi 0, %s87
    %s104 = sphi 0, %s88
  $region4: #{tpu_custom_call.1} parent=0 // loop_header_branch
    %11 = sbr.rel (%p9) target = $region8
  $region5: #{tpu_custom_call.1} parent=0 // loop_body
    %s13 = ssub.s32 %s8, 1
    %s14 = ssub.s32 %s8, 2
    %s21 = sadd.s32 1, %s16
    %p22 = scmp.ge.s32.totalorder %s21, 1
    %s23 = scalar_select %p22, 0, %s21
    %s24 = sadd.s32 1, %s15
    %s25 = scalar_select %p22, %s24, %s15
    %p26 = scmp.ge.s32.totalorder %s25, 2
    %s27 = scalar_select %p26, 0, %s25
    %s28 = ssub.s32 %s15, %s27
    %p29 = scmp.eq.s32.totalorder %s28, 0
    %s31 = sadd.s32 %s30, 1
    %s32 = scalar_select %p29, %s30, %s31
    %p35 = pneg %p29
    %p36 = scmp.eq.s32.totalorder %s8, 1
    %p37 = por %p35, %p36
    %p38 = scmp.ne.s32.totalorder %s30, %s33
    %p39 = scmp.eq.s32.totalorder %s8, 0
    %p40 = por %p38, %p39
    %p41 = scmp.ne.s32.totalorder %s30, %s33
    %p42 = scmp.eq.s32.totalorder %s13, 1
    %p43 = por %p41, %p42
    %p44 = scmp.ne.s32.totalorder %s33, %s34
    %p45 = scmp.eq.s32.totalorder %s13, 0
    %p46 = por %p44, %p45
    %p47 = scmp.ne.s32.totalorder %s33, %s34
    %p48 = scmp.eq.s32.totalorder %s14, 1
    %p49 = por %p47, %p48
    %p51 = scmp.ne.s32.totalorder %s34, %s50
    %p52 = scmp.eq.s32.totalorder %s14, 0
    %p53 = por %p51, %p52
    %s54 = ssub.s32 %s15, %s27
    %s55 = ssub.s32 %s16, %s23
    %s56 = sor.u32 %s54, %s55
    %p57 = scmp.eq.s32.totalorder %s56, 0
    %s59 = sadd.s32 %s58, 1
    %s60 = scalar_select %p57, %s58, %s59
    %p63 = pneg %p57
    %p64 = scmp.eq.s32.totalorder %s8, 1
    %p65 = por %p63, %p64
    %p66 = scmp.ne.s32.totalorder %s58, %s61
    %p67 = scmp.eq.s32.totalorder %s8, 0
    %p68 = por %p66, %p67
    %p69 = scmp.ne.s32.totalorder %s58, %s61
    %p70 = scmp.eq.s32.totalorder %s13, 1
    %p71 = por %p69, %p70
    %p72 = scmp.ne.s32.totalorder %s61, %s62
    %p73 = scmp.eq.s32.totalorder %s13, 0
    %p74 = por %p72, %p73
    %p75 = scmp.ne.s32.totalorder %s61, %s62
    %p76 = scmp.eq.s32.totalorder %s14, 1
    %p77 = por %p75, %p76
    %p79 = scmp.ne.s32.totalorder %s62, %s78
    %p80 = scmp.eq.s32.totalorder %s14, 0
    %p81 = por %p79, %p80
    %s82 = ssub.s32 %s15, %s27
    %p83 = scmp.eq.s32.totalorder %s82, 0
    %s85 = sadd.s32 %s84, 1
    %s86 = scalar_select %p83, %s84, %s85
    %p89 = pneg %p83
    %p90 = scmp.eq.s32.totalorder %s8, 1
    %p91 = por %p89, %p90
    %p92 = scmp.ne.s32.totalorder %s84, %s87
    %p93 = scmp.eq.s32.totalorder %s8, 0
    %p94 = por %p92, %p93
    %p95 = scmp.ne.s32.totalorder %s84, %s87
    %p96 = scmp.eq.s32.totalorder %s13, 1
    %p97 = por %p95, %p96
    %p98 = scmp.ne.s32.totalorder %s87, %s88
    %p99 = scmp.eq.s32.totalorder %s13, 0
    %p100 = por %p98, %p99
    %p101 = scmp.ne.s32.totalorder %s87, %s88
    %p102 = scmp.eq.s32.totalorder %s14, 1
    %p103 = por %p101, %p102
    %p105 = scmp.ne.s32.totalorder %s88, %s104
    %p106 = scmp.eq.s32.totalorder %s14, 0
    %p107 = por %p105, %p106
    %p108 = scmp.le.s32.totalorder 1, %s8
    %p109 = scmp.lt.s32.totalorder %s8, 3
    %p110 = pnand %p108, %p109
    %p111 = pneg %p110
    // Predicated region
    $region9: #{tpu_custom_call.1} parent=5 // pred_check
      _
    $region10: #{tpu_custom_call.1} parent=5 // pred_check_branch
      %113 = sbr.rel (%p110) target = $region12
    $region11: #{tpu_custom_call.1} parent=5 // pred_region
      %s114 = ssub.s32 %s8, 1
    $region12: #{tpu_custom_call.1} parent=5 // pred_fallthru
      _
    %p115 = scmp.lt.s32.totalorder %s8, 2
    // Predicated region
    $region13: #{tpu_custom_call.1} parent=5 // pred_check
      %p116 = pneg %p115
    $region14: #{tpu_custom_call.1} parent=5 // pred_check_branch
      %118 = sbr.rel (%p116) target = $region16
    $region15: #{tpu_custom_call.1} parent=5 // pred_region
      // Predicated region
      $region17: #{tpu_custom_call.1} parent=15 // pred_check
        %p119 = pneg %p40
      $region18: #{tpu_custom_call.1} parent=15 // pred_check_branch
        %121 = sbr.rel (%p119) target = $region20
      $region19: #{tpu_custom_call.1} parent=15 // pred_region
        %p122 = scmp.lt.s32.totalorder %s15, 1
        %s123 = scalar_select %p122, %s15, 1
        %s124 = smul.addr %s123, 8
        %s125 = scalar_lea.vmem %s0, %s124
      $region20: #{tpu_custom_call.1} parent=15 // pred_fallthru
        _
      // Predicated region
      $region21: #{tpu_custom_call.1} parent=15 // pred_check
        %p126 = pneg %p68
      $region22: #{tpu_custom_call.1} parent=15 // pred_check_branch
        %128 = sbr.rel (%p126) target = $region24
      $region23: #{tpu_custom_call.1} parent=15 // pred_region
        %p129 = scmp.lt.s32.totalorder %s15, 1
        %s130 = scalar_select %p129, %s15, 1
        %p131 = scmp.lt.s32.totalorder %s16, 0
        %s132 = scalar_select %p131, %s16, 0
        %s133 = sadd.s32 %s132, %s130
        %s134 = smul.addr %s133, 8
        %s135 = scalar_lea.vmem %s1, %s134
      $region24: #{tpu_custom_call.1} parent=15 // pred_fallthru
        _
    $region16: #{tpu_custom_call.1} parent=5 // pred_fallthru
      _
    %p136 = scmp.le.s32.totalorder 1, %s8
    %p137 = scmp.lt.s32.totalorder %s8, 3
    %p138 = pnand %p136, %p137
    %p139 = pneg %p138
    // Predicated region
    $region25: #{tpu_custom_call.1} parent=5 // pred_check
      _
    $region26: #{tpu_custom_call.1} parent=5 // pred_check_branch
      %141 = sbr.rel (%p138) target = $region28
    $region27: #{tpu_custom_call.1} parent=5 // pred_region
      %s142 = ssub.s32 %s8, 1
      %p143 = scmp.lt.s32.totalorder %s17, 1
      %s144 = scalar_select %p143, %s17, 1
      %s145 = smul.addr %s144, 8
      %s146 = scalar_lea.vmem %s0, %s145
      %p147 = pneg %p46
      %p148 = pneg %p43
      %p149 = scmp.lt.s32.totalorder %s17, 1
      %s150 = scalar_select %p149, %s17, 1
      %p151 = scmp.lt.s32.totalorder %s18, 0
      %s152 = scalar_select %p151, %s18, 0
      %s153 = sadd.s32 %s152, %s150
      %s154 = smul.addr %s153, 8
      %s155 = scalar_lea.vmem %s1, %s154
      %p156 = pneg %p74
      %p157 = pneg %p71
      %p158 = pneg %p100
      %p159 = pneg %p97
      %p160 = scmp.lt.s32.totalorder %s17, 1
      %s161 = scalar_select %p160, %s17, 1
      %s162 = smul.addr %s161, 8
      %s163 = scalar_lea.vmem %s2, %s162
      %p164 = scmp.lt.s32.totalorder %s17, 1
      %s165 = scalar_select %p164, %s17, 1
      %s166 = smul.addr %s165, 8
      %s167 = scalar_lea.vmem %s0, %s166
      %p168 = scmp.lt.s32.totalorder %s17, 1
      %s169 = scalar_select %p168, %s17, 1
      %p170 = scmp.lt.s32.totalorder %s18, 0
      %s171 = scalar_select %p170, %s18, 0
      %s172 = sadd.s32 %s171, %s169
      %s173 = smul.addr %s172, 8
      %s174 = scalar_lea.vmem %s1, %s173
      %p175 = scmp.lt.s32.totalorder %s17, 1
      %s176 = scalar_select %p175, %s17, 1
      %s177 = smul.addr %s176, 8
      %s178 = scalar_lea.vmem %s2, %s177
      %p179 = scmp.eq.s32.totalorder %s18, 0
      // Predicated region
      $region29: #{tpu_custom_call.1} parent=27 // pred_check
        %p180 = pneg %p179
      $region30: #{tpu_custom_call.1} parent=27 // pred_check_branch
        %182 = sbr.rel (%p180) target = $region32
      $region31: #{tpu_custom_call.1} parent=27 // pred_region
        %vm183 = vcmask 7168
        %184 = vst.msk [vmem:[%s178] sm:$0xff] %vm183, 0.0
      $region32: #{tpu_custom_call.1} parent=27 // pred_fallthru
        _
      %v185 = vld [vmem:[%s167] sm:$0xff]
      %v186 = vld [vmem:[%s174] sm:$0xff]
      %v187 = vlaneseq
      %v188 = vand.u32 %v187, 127
      %s189 = smul.u32 %s18, 32
      %v190 = vstv %s189
      %v191 = vadd.s32 %v188, %v190
      %192 = vset.pattern.permute.xlu0 0
      %193 = vperm.xlu0 %192, %v185
      %v194 = vpop.permute.xlu0 %193
      %vm195 = vcmp.eq.s32.totalorder %v191, %v194
      %v196 = vsel %vm195, 0.9, 0.0032258064
      %v197 = vld [vmem:[%s178] sm:$0xff]
      %v198 = vmul.f32 %v196, %v186
      %vm199 = vcmask 261120
      %v200 = vsel %vm199, %v198, 0.0
      %201 = vadd.xlane.f32.xlu0 %v200
      %v202 = vpop.xlane.xlu0 %201
      %v203 = vadd.f32 %v197, %v202
      %vm204 = vcmask 7168
      %205 = vst.msk [vmem:[%s178] sm:$0xff] %vm204, %v203
      // Predicated region
      $region33: #{tpu_custom_call.1} parent=27 // pred_check
        %p206 = pneg %p179
      $region34: #{tpu_custom_call.1} parent=27 // pred_check_branch
        %208 = sbr.rel (%p206) target = $region36
      $region35: #{tpu_custom_call.1} parent=27 // pred_region
        %v209 = vld [vmem:[%s178] sm:$0xff]
        %v210 = vsub.f32 0.0, %v209
        %vm211 = vcmp.eq.s32.totalorder %v185, 0
        %v212 = vsel %vm211, 0.0, %v210
        %213 = vst.msk [vmem:[%s178] sm:$0xff] %vm204, %v212
      $region36: #{tpu_custom_call.1} parent=27 // pred_fallthru
        _
      %p214 = scmp.lt.s32.totalorder %s17, 1
      %s215 = scalar_select %p214, %s17, 1
      %s216 = smul.addr %s215, 8
      %s217 = scalar_lea.vmem %s2, %s216
      // Predicated region
      $region37: #{tpu_custom_call.1} parent=27 // pred_check
        %p218 = pneg %p97
      $region38: #{tpu_custom_call.1} parent=27 // pred_check_branch
        %220 = sbr.rel (%p218) target = $region40
      $region39: #{tpu_custom_call.1} parent=27 // pred_region
        _
      $region40: #{tpu_custom_call.1} parent=27 // pred_fallthru
        _
    $region28: #{tpu_custom_call.1} parent=5 // pred_fallthru
      _
    %p221 = scmp.le.s32.totalorder 2, %s8
    // Predicated region
    $region41: #{tpu_custom_call.1} parent=5 // pred_check
      %p222 = pneg %p221
    $region42: #{tpu_custom_call.1} parent=5 // pred_check_branch
      %224 = sbr.rel (%p222) target = $region44
    $region43: #{tpu_custom_call.1} parent=5 // pred_region
      %s225 = ssub.s32 %s8, 2
      // Predicated region
      $region45: #{tpu_custom_call.1} parent=43 // pred_check
        %p226 = pneg %p103
      $region46: #{tpu_custom_call.1} parent=43 // pred_check_branch
        %228 = sbr.rel (%p226) target = $region48
      $region47: #{tpu_custom_call.1} parent=43 // pred_region
        %p229 = scmp.lt.s32.totalorder %s19, 1
        %s230 = scalar_select %p229, %s19, 1
        %s231 = smul.addr %s230, 8
        %s232 = scalar_lea.vmem %s2, %s231
      $region48: #{tpu_custom_call.1} parent=43 // pred_fallthru
        _
    $region44: #{tpu_custom_call.1} parent=5 // pred_fallthru
      _
  $region6: #{tpu_custom_call.1} parent=0 // loop_footer
    %s12 = sadd.s32 1, %s8
  $region7: #{tpu_custom_call.1} parent=0 // loop_footer_branch
    %7 = sbr.rel target = $region3
  $region8: #{tpu_custom_call.1} parent=0 // loop_exit
    _

</llo_original>
